<compile_context>
chip_gen: v6e
topology: v6e:2x2x1
jax: 0.10.0
libtpu: 0.0.40
codegen_flags: <defaults>
</compile_context>

<pallas_src>
import functools

import jax
import jax.numpy as jnp
from jax.experimental import pallas as pl
from jax.experimental.pallas import tpu as pltpu


A_LANES = 128  # fc2 lane padding: keeps the fc2 MXU tile lane-dense/unmasked.


def _round_up(x, m):
    return ((x + m - 1) // m) * m


def qnetwork_kernel(x_ref, w1_ref, b1_ref, w2_ref, b2_ref, o_ref):
    # x_ref : (TB, S_PAD)     batch tile of states (features zero-padded to 8)
    # w1_ref: (S_PAD, H)      fc1 weight, rows S..S_PAD-1 are zero
    # b1_ref: (1, H)          fc1 bias
    # w2_ref: (H, A_LANES)    fc2 weight, action dim zero-padded to 128 lanes
    # b2_ref: (1, A_LANES)    fc2 bias, padded
    # o_ref : (TB, A)         only the real action columns are written back
    a_dim = o_ref.shape[1]

    # fc1: short-K MXU matmul (K = S_PAD = 8); padded rows/cols contribute 0.
    h = jnp.dot(x_ref[...], w1_ref[...], preferred_element_type=jnp.float32)
    h = jnp.maximum(h + b1_ref[...], 0.0)  # + bias, ReLU on the VPU

    # fc2: lane-dense (H x 128) MXU tile, f32 accumulation.
    q = jnp.dot(h, w2_ref[...], preferred_element_type=jnp.float32)
    q = q + b2_ref[...]

    # Store only the real action columns -> tiny (TB, A) HBM writeback.
    o_ref[...] = q[:, :a_dim].astype(o_ref.dtype)


def prepare_params(w1, b1, w2, b2):
    """One-time parameter padding (call at init / after each optimizer step).

    w1: (S, H), b1: (H,) or (1, H), w2: (H, A), b2: (A,) or (1, A)
    Returns (w1p (S_PAD, H), b1p (1, H), w2p (H, 128), b2p (1, 128)).
    Hoisted out of the per-call forward so no padding ops run in the hot loop.
    """
    S, H = w1.shape
    A = w2.shape[-1]
    s_pad = _round_up(S, 8)
    w1p = jnp.zeros((s_pad, H), jnp.float32).at[:S, :].set(w1.astype(jnp.float32))
    b1p = jnp.asarray(b1, jnp.float32).reshape(1, H)
    w2p = jnp.zeros((H, A_LANES), jnp.float32).at[:, :A].set(w2.astype(jnp.float32))
    b2p = jnp.zeros((1, A_LANES), jnp.float32).at[:, :A].set(
        jnp.asarray(b2, jnp.float32).reshape(1, A))
    return w1p, b1p, w2p, b2p


@functools.partial(jax.jit, static_argnames=("action_dim", "num_blocks"))
def qnetwork_forward(state, w1p, b1p, w2p, b2p, *, action_dim, num_blocks=1):
    """Fused forward pass of QNetwork.

    state : (B, S) f32
    w1p, b1p, w2p, b2p : padded params from prepare_params()
    action_dim : real number of actions A (static)
    num_blocks : grid steps over the batch; 1 for v5e/v6e, 2 for v7x (one per TC)
    returns (B, A) f32 Q-values
    """
    B, S = state.shape
    S_PAD, H = w1p.shape
    A = action_dim

    if num_blocks <= 1:
        num_blocks = 1
        tb = b_pad = B  # block == full array: no batch padding or 8-alignment needed
    else:
        tb = _round_up(-(-B // num_blocks), 8)
        b_pad = tb * num_blocks

    # Single cheap pad (feature dim to S_PAD, plus batch rows only on the
    # multi-block path). Callers in a hot DQN loop can pre-pad states to S_PAD
    # to make this a no-op.
    if b_pad != B or S_PAD != S:
        state = jnp.pad(state.astype(jnp.float32),
                        ((0, b_pad - B), (0, S_PAD - S)))

    out = pl.pallas_call(
        qnetwork_kernel,
        out_shape=jax.ShapeDtypeStruct((b_pad, A), jnp.float32),
        grid=(num_blocks,),
        in_specs=[
            # Batch stream (only axis tiled by the grid).
            pl.BlockSpec((tb, S_PAD), lambda i: (i, 0)),
            # Weights / biases: constant index_map -> VMEM-resident across grid.
            pl.BlockSpec((S_PAD, H), lambda i: (0, 0)),
            pl.BlockSpec((1, H), lambda i: (0, 0)),
            pl.BlockSpec((H, A_LANES), lambda i: (0, 0)),
            pl.BlockSpec((1, A_LANES), lambda i: (0, 0)),
        ],
        out_specs=pl.BlockSpec((tb, A), lambda i: (i, 0)),
        compiler_params=pltpu.CompilerParams(
            dimension_semantics=("parallel",),
        ),
    )(state, w1p, b1p, w2p, b2p)

    # Only padded batch rows (multi-block path) need slicing; columns are exact.
    return out if b_pad == B else out[:B]


def init_params(key, state_dim, action_dim, hidden_dim=64):
    """Deterministic init mimicking nn.Linear default U[-1/sqrt(fan_in), 1/sqrt(fan_in)]."""
    k1, k2, k3, k4 = jax.random.split(key, 4)
    lim1 = 1.0 / jnp.sqrt(jnp.float32(state_dim))
    lim2 = 1.0 / jnp.sqrt(jnp.float32(hidden_dim))
    w1 = jax.random.uniform(k1, (state_dim, hidden_dim), jnp.float32, -lim1, lim1)
    b1 = jax.random.uniform(k2, (hidden_dim,), jnp.float32, -lim1, lim1)
    w2 = jax.random.uniform(k3, (hidden_dim, action_dim), jnp.float32, -lim2, lim2)
    b2 = jax.random.uniform(k4, (action_dim,), jnp.float32, -lim2, lim2)
    return w1, b1, w2, b2


if __name__ == "__main__":
    # CartPole-v1: state_dim=4, action_dim=2, hidden_dim=64; small batch of 32.
    STATE_DIM, ACTION_DIM, HIDDEN_DIM = 4, 2, 64
    BATCH = 32

    key = jax.random.PRNGKey(0)
    kx, kp = jax.random.split(key)
    state = jax.random.normal(kx, (BATCH, STATE_DIM), jnp.float32)
    w1, b1, w2, b2 = init_params(kp, STATE_DIM, ACTION_DIM, HIDDEN_DIM)

    # Pad parameters once, outside the hot path.
    w1p, b1p, w2p, b2p = prepare_params(w1, b1, w2, b2)

    # Default path: single grid step, block == full batch.
    q_values = qnetwork_forward(state, w1p, b1p, w2p, b2p, action_dim=ACTION_DIM)
    q_values = jax.block_until_ready(q_values)

    # Reference check in plain JAX (same math as the PyTorch forward).
    ref = jnp.maximum(state @ w1 + b1, 0.0) @ w2 + b2
    assert q_values.shape == (BATCH, ACTION_DIM)
    assert jnp.allclose(q_values, ref, atol=1e-4, rtol=1e-5)

    # Multi-block path (e.g. v7x: one step per TensorCore) with a ragged batch,
    # exercising the row-padding + row-slice path.
    q_small = jax.block_until_ready(
        qnetwork_forward(state[:7], w1p, b1p, w2p, b2p,
                         action_dim=ACTION_DIM, num_blocks=2))
    assert q_small.shape == (7, ACTION_DIM)
    assert jnp.allclose(q_small, ref[:7], atol=1e-4, rtol=1e-5)

    print("KERNEL_OK")
</pallas_src>

<mosaic_0001>
module attributes {stable_mosaic.version = 11 : i64} {
  func.func @qnetwork_kernel(%arg0: i32, %arg1: memref<32x8xf32, #tpu.memory_space<vmem>>, %arg2: memref<8x64xf32, #tpu.memory_space<vmem>>, %arg3: memref<1x64xf32, #tpu.memory_space<vmem>>, %arg4: memref<64x128xf32, #tpu.memory_space<vmem>>, %arg5: memref<1x128xf32, #tpu.memory_space<vmem>>, %arg6: memref<32x2xf32, #tpu.memory_space<vmem>>) attributes {dimension_semantics = [#tpu.dimension_semantics<parallel>], iteration_bounds = array<i64: 1>, scalar_prefetch = 0 : i64, scratch_operands = 0 : i64, tpu.core_type = #tpu.core_type<tc>, window_params = [{transform_indices = @transform_0, window_bounds = array<i64: 32, 8>}, {pipeline_mode = #tpu.pipeline_mode<synchronous>, transform_indices = @transform_1, window_bounds = array<i64: 8, 64>}, {pipeline_mode = #tpu.pipeline_mode<synchronous>, transform_indices = @transform_2, window_bounds = array<i64: 1, 64>}, {pipeline_mode = #tpu.pipeline_mode<synchronous>, transform_indices = @transform_3, window_bounds = array<i64: 64, 128>}, {pipeline_mode = #tpu.pipeline_mode<synchronous>, transform_indices = @transform_4, window_bounds = array<i64: 1, 128>}, {transform_indices = @transform_5, window_bounds = array<i64: 32, 2>}]} {
    %c0 = arith.constant 0 : index
    %c0_0 = arith.constant 0 : index
    %0 = vector.load %arg1[%c0, %c0_0] : memref<32x8xf32, #tpu.memory_space<vmem>>, vector<32x8xf32>
    %c0_1 = arith.constant 0 : index
    %c0_2 = arith.constant 0 : index
    %1 = vector.load %arg2[%c0_1, %c0_2] : memref<8x64xf32, #tpu.memory_space<vmem>>, vector<8x64xf32>
    %cst = arith.constant dense<0.000000e+00> : vector<32x64xf32>
    %2 = tpu.matmul %0, %1, %cst {dimension_numbers = #tpu.dot_dimension_numbers<[1], [0], [0], [1], [0, 0, 1, 1], [], []>} : vector<32x8xf32>, vector<8x64xf32>, vector<32x64xf32> -> vector<32x64xf32>
    %c0_3 = arith.constant 0 : index
    %c0_4 = arith.constant 0 : index
    %3 = vector.load %arg3[%c0_3, %c0_4] : memref<1x64xf32, #tpu.memory_space<vmem>>, vector<1x64xf32>
    %4 = vector.broadcast %3 : vector<1x64xf32> to vector<32x64xf32>
    %5 = arith.addf %2, %4 : vector<32x64xf32>
    %cst_5 = arith.constant 0.000000e+00 : f32
    %6 = vector.broadcast %cst_5 : f32 to vector<32x64xf32>
    %7 = arith.maximumf %5, %6 : vector<32x64xf32>
    %c0_6 = arith.constant 0 : index
    %c0_7 = arith.constant 0 : index
    %8 = vector.load %arg4[%c0_6, %c0_7] : memref<64x128xf32, #tpu.memory_space<vmem>>, vector<64x128xf32>
    %cst_8 = arith.constant dense<0.000000e+00> : vector<32x128xf32>
    %9 = tpu.matmul %7, %8, %cst_8 {dimension_numbers = #tpu.dot_dimension_numbers<[1], [0], [0], [1], [0, 0, 1, 1], [], []>} : vector<32x64xf32>, vector<64x128xf32>, vector<32x128xf32> -> vector<32x128xf32>
    %c0_9 = arith.constant 0 : index
    %c0_10 = arith.constant 0 : index
    %10 = vector.load %arg5[%c0_9, %c0_10] : memref<1x128xf32, #tpu.memory_space<vmem>>, vector<1x128xf32>
    %11 = vector.broadcast %10 : vector<1x128xf32> to vector<32x128xf32>
    %12 = arith.addf %9, %11 : vector<32x128xf32>
    %13 = vector.extract_strided_slice %12 {offsets = [0, 0], sizes = [32, 2], strides = [1, 1]} : vector<32x128xf32> to vector<32x2xf32>
    %c0_11 = arith.constant 0 : index
    %c0_12 = arith.constant 0 : index
    %14 = vector.load %arg6[%c0_11, %c0_12] : memref<32x2xf32, #tpu.memory_space<vmem>>, vector<32x2xf32>
    tpu.vector_store %arg6[%c0_11, %c0_12], %13 {strides = array<i32>} : memref<32x2xf32, #tpu.memory_space<vmem>>, vector<32x2xf32>,
    return
  }
  func.func @transform_0(%arg0: i32) -> (i32, i32) {
    %c0_i32 = arith.constant 0 : i32
    %c0_i32_0 = arith.constant 0 : i32
    return %arg0, %c0_i32 : i32, i32
  }
  func.func @transform_1(%arg0: i32) -> (i32, i32) {
    %c0_i32 = arith.constant 0 : i32
    %c0_i32_0 = arith.constant 0 : i32
    %c0_i32_1 = arith.constant 0 : i32
    return %c0_i32, %c0_i32_0 : i32, i32
  }
  func.func @transform_2(%arg0: i32) -> (i32, i32) {
    %c0_i32 = arith.constant 0 : i32
    %c0_i32_0 = arith.constant 0 : i32
    %c0_i32_1 = arith.constant 0 : i32
    return %c0_i32, %c0_i32_0 : i32, i32
  }
  func.func @transform_3(%arg0: i32) -> (i32, i32) {
    %c0_i32 = arith.constant 0 : i32
    %c0_i32_0 = arith.constant 0 : i32
    %c0_i32_1 = arith.constant 0 : i32
    return %c0_i32, %c0_i32_0 : i32, i32
  }
  func.func @transform_4(%arg0: i32) -> (i32, i32) {
    %c0_i32 = arith.constant 0 : i32
    %c0_i32_0 = arith.constant 0 : i32
    %c0_i32_1 = arith.constant 0 : i32
    return %c0_i32, %c0_i32_0 : i32, i32
  }
  func.func @transform_5(%arg0: i32) -> (i32, i32) {
    %c0_i32 = arith.constant 0 : i32
    %c0_i32_0 = arith.constant 0 : i32
    return %arg0, %c0_i32 : i32, i32
  }
}

</mosaic_0001>

<llo_original>
// kernel: qnetwork_forward.1
$region0: #{qnetwork_forward.1}
  #allocation0 [shape = 'u32[]', space=smem, size = 0x4, offset = 0x4, fixed_abs, tag = 'smem constant byte address 0x4 - core index']
  #allocation1 [shape = 'u32[144,128]{1,0:T(1,128)}', space=vmem, size = 0x12000, scoped, tag = 'internal scratch']
  %s0 = inlined_call_operand.vmem [shape: f32[32,8], index: 0, kind: input, shape index: {}]
  %s1 = inlined_call_operand.vmem [shape: f32[8,64], index: 1, kind: input, shape index: {}]
  %s2 = inlined_call_operand.vmem [shape: f32[1,64], index: 2, kind: input, shape index: {}]
  %s3 = inlined_call_operand.vmem [shape: f32[64,128], index: 3, kind: input, shape index: {}]
  %s4 = inlined_call_operand.vmem [shape: f32[1,128], index: 4, kind: input, shape index: {}]
  %s5 = inlined_call_operand.vmem [shape: f32[32,2], index: 5, kind: output, shape index: {}]
  %s6 = sld [smem:[#allocation0]]
  $region30: #{qnetwork_forward.1} parent=0
    _
  %s8 = ssub.s32 1, %s6
  %s9 = scalar_select 0, %s8, %s6
  // Predicated region
  $region2: #{qnetwork_forward.1} parent=0 // pred_check
    _
  $region3: #{qnetwork_forward.1} parent=0 // pred_check_branch
    %11 = sbr.rel (0) target = $region5
  $region4: #{qnetwork_forward.1} parent=0 // pred_region
    _
  $region5: #{qnetwork_forward.1} parent=0 // pred_fallthru
    _
  // Predicated region
  $region6: #{qnetwork_forward.1} parent=0 // pred_check
    _
  $region7: #{qnetwork_forward.1} parent=0 // pred_check_branch
    %13 = sbr.rel (0) target = $region9
  $region8: #{qnetwork_forward.1} parent=0 // pred_region
    _
  $region9: #{qnetwork_forward.1} parent=0 // pred_fallthru
    _
  // Predicated region
  $region10: #{qnetwork_forward.1} parent=0 // pred_check
    _
  $region11: #{qnetwork_forward.1} parent=0 // pred_check_branch
    %15 = sbr.rel (0) target = $region13
  $region12: #{qnetwork_forward.1} parent=0 // pred_region
    _
  $region13: #{qnetwork_forward.1} parent=0 // pred_fallthru
    _
  // Predicated region
  $region14: #{qnetwork_forward.1} parent=0 // pred_check
    _
  $region15: #{qnetwork_forward.1} parent=0 // pred_check_branch
    %17 = sbr.rel (0) target = $region17
  $region16: #{qnetwork_forward.1} parent=0 // pred_region
    _
  $region17: #{qnetwork_forward.1} parent=0 // pred_fallthru
    _
  // Predicated region
  $region18: #{qnetwork_forward.1} parent=0 // pred_check
    _
  $region19: #{qnetwork_forward.1} parent=0 // pred_check_branch
    %19 = sbr.rel (0) target = $region21
  $region20: #{qnetwork_forward.1} parent=0 // pred_region
    _
  $region21: #{qnetwork_forward.1} parent=0 // pred_fallthru
    _
  %v20 = vld [vmem:[%s0] sm:$0xff]
  %v21 = vld [vmem:[%s0 + $0x8] sm:$0xff]
  %v22 = vld [vmem:[%s0 + $0x10] sm:$0xff]
  %v23 = vld [vmem:[%s0 + $0x18] sm:$0xff]
  %v24 = vld [vmem:[%s1] sm:$0xff]
  %v25 = vld [vmem:[%s2] sm:$0x1]
  %v27 = vlaneseq
  %v28 = vshrl.u32 %v27, 7
  %v29 = vsub.s32 0, %v28
  %v30 = vrot.slane %v25, %v29
  %vm32 = vcmask 64512
  %v34 = vsel %vm32, %v20, 0
  %v37 = vsel %vm32, %v21, 0
  %v40 = vsel %vm32, %v22, 0
  %v43 = vsel %vm32, %v23, 0
  %45 = vmatprep.subr.mxu0 0.0
  %46 = vmatpush1.msra.mxu0 0.0
  %47 = vmatprep.subr.mxu0 0.0
  %48 = vmatpush1.msra.mxu0 0.0
  %49 = vmatprep.subr.mxu0 0.0
  %50 = vmatpush1.msra.mxu0 0.0
  %51 = vmatprep.subr.mxu0 0.0
  %52 = vmatpush1.msra.mxu0 0.0
  %53 = vmatprep.subr.mxu0 0.0
  %54 = vmatpush1.msra.mxu0 0.0
  %55 = vmatprep.subr.mxu0 0.0
  %56 = vmatpush1.msra.mxu0 0.0
  %57 = vmatprep.subr.mxu0 0.0
  %58 = vmatpush1.msra.mxu0 0.0
  %59 = vmatprep.subr.mxu0 0.0
  %60 = vmatpush1.msra.mxu0 0.0
  %61 = vmatprep.subr.mxu0 0.0
  %62 = vmatpush1.msra.mxu0 0.0
  %63 = vmatprep.subr.mxu0 0.0
  %64 = vmatpush1.msra.mxu0 0.0
  %65 = vmatprep.subr.mxu0 0.0
  %66 = vmatpush1.msra.mxu0 0.0
  %67 = vmatprep.subr.mxu0 0.0
  %68 = vmatpush1.msra.mxu0 0.0
  %69 = vmatprep.subr.mxu0 0.0
  %70 = vmatpush1.msra.mxu0 0.0
  %71 = vmatprep.subr.mxu0 0.0
  %72 = vmatpush1.msra.mxu0 0.0
  %73 = vmatprep.subr.mxu0 0.0
  %74 = vmatpush1.msra.mxu0 0.0
  %75 = vmatprep.subr.mxu0 0.0
  %76 = vmatpush1.msra.mxu0 %v24
  %77 = vmatprep.subr.mxu0 0.0
  %78 = vmatpush2.msra.mxu0 0.0
  %79 = vmatprep.subr.mxu0 0.0
  %80 = vmatpush2.msra.mxu0 0.0
  %81 = vmatprep.subr.mxu0 0.0
  %82 = vmatpush2.msra.mxu0 0.0
  %83 = vmatprep.subr.mxu0 0.0
  %84 = vmatpush2.msra.mxu0 0.0
  %85 = vmatprep.subr.mxu0 0.0
  %86 = vmatpush2.msra.mxu0 0.0
  %87 = vmatprep.subr.mxu0 0.0
  %88 = vmatpush2.msra.mxu0 0.0
  %89 = vmatprep.subr.mxu0 0.0
  %90 = vmatpush2.msra.mxu0 0.0
  %91 = vmatprep.subr.mxu0 0.0
  %92 = vmatpush2.msra.mxu0 0.0
  %93 = vmatprep.subr.mxu0 0.0
  %94 = vmatpush2.msra.mxu0 0.0
  %95 = vmatprep.subr.mxu0 0.0
  %96 = vmatpush2.msra.mxu0 0.0
  %97 = vmatprep.subr.mxu0 0.0
  %98 = vmatpush2.msra.mxu0 0.0
  %99 = vmatprep.subr.mxu0 0.0
  %100 = vmatpush2.msra.mxu0 0.0
  %101 = vmatprep.subr.mxu0 0.0
  %102 = vmatpush2.msra.mxu0 0.0
  %103 = vmatprep.subr.mxu0 0.0
  %104 = vmatpush2.msra.mxu0 0.0
  %105 = vmatprep.subr.mxu0 0.0
  %106 = vmatpush2.msra.mxu0 0.0
  %107 = vmatprep.subr.mxu0 0.0
  %108 = vmatpush2.msra.mxu0 0.0
  %109 = vmatprep.mubr.f32.mxu0 0.0
  %110 = vmatmul.mubr.f32.gmra.mxu0 %v34
  %v111 = vpop.f32.mrf.mxu0
  %v112 = vadd.f32 %v30, %v111
  %v113 = vpop.f32.mrf.mxu0
  %114 = vmatprep.mubr.f32.mxu0 0.0
  %115 = vmatmul.mubr.f32.gmra.mxu0 %v37
  %v116 = vpop.f32.mrf.mxu0
  %v117 = vadd.f32 %v30, %v116
  %v118 = vpop.f32.mrf.mxu0
  %119 = vmatprep.mubr.f32.mxu0 0.0
  %120 = vmatmul.mubr.f32.gmra.mxu0 %v40
  %v121 = vpop.f32.mrf.mxu0
  %v122 = vadd.f32 %v30, %v121
  %v123 = vpop.f32.mrf.mxu0
  %124 = vmatprep.mubr.f32.mxu0 0.0
  %125 = vmatmul.mubr.f32.gmra.mxu0 %v43
  %v126 = vpop.f32.mrf.mxu0
  %v127 = vadd.f32 %v30, %v126
  %v128 = vpop.f32.mrf.mxu0
  %129 = vdwg.mxu0
  %v130 = vmax.f32 %v112, 0.0
  %v131 = vmax.f32 %v117, 0.0
  %v132 = vmax.f32 %v122, 0.0
  %v133 = vmax.f32 %v127, 0.0
  %v134 = vld [vmem:[%s3] sm:$0xff]
  %v135 = vld [vmem:[%s3 + $0x8] sm:$0xff]
  %v136 = vld [vmem:[%s3 + $0x10] sm:$0xff]
  %v137 = vld [vmem:[%s3 + $0x18] sm:$0xff]
  %v138 = vld [vmem:[%s3 + $0x20] sm:$0xff]
  %v139 = vld [vmem:[%s3 + $0x28] sm:$0xff]
  %v140 = vld [vmem:[%s3 + $0x30] sm:$0xff]
  %v141 = vld [vmem:[%s3 + $0x38] sm:$0xff]
  %v142 = vld [vmem:[%s4] sm:$0x1]
  %v144 = vlaneseq
  %v145 = vshrl.u32 %v144, 7
  %v146 = vsub.s32 0, %v145
  %v147 = vrot.slane %v142, %v146
  %vm149 = vcmask 523264
  %v151 = vsel %vm149, %v130, 0
  %v154 = vsel %vm149, %v131, 0
  %v157 = vsel %vm149, %v132, 0
  %v160 = vsel %vm149, %v133, 0
  %162 = vmatprep.subr.mxu0 0.0
  %163 = vmatpush1.msra.mxu0 0.0
  %164 = vmatprep.subr.mxu0 0.0
  %165 = vmatpush1.msra.mxu0 0.0
  %166 = vmatprep.subr.mxu0 0.0
  %167 = vmatpush1.msra.mxu0 0.0
  %168 = vmatprep.subr.mxu0 0.0
  %169 = vmatpush1.msra.mxu0 0.0
  %170 = vmatprep.subr.mxu0 0.0
  %171 = vmatpush1.msra.mxu0 0.0
  %172 = vmatprep.subr.mxu0 0.0
  %173 = vmatpush1.msra.mxu0 0.0
  %174 = vmatprep.subr.mxu0 0.0
  %175 = vmatpush1.msra.mxu0 0.0
  %176 = vmatprep.subr.mxu0 0.0
  %177 = vmatpush1.msra.mxu0 0.0
  %178 = vmatprep.subr.mxu0 0.0
  %179 = vmatpush1.msra.mxu0 %v141
  %180 = vmatprep.subr.mxu0 0.0
  %181 = vmatpush1.msra.mxu0 %v140
  %182 = vmatprep.subr.mxu0 0.0
  %183 = vmatpush1.msra.mxu0 %v139
  %184 = vmatprep.subr.mxu0 0.0
  %185 = vmatpush1.msra.mxu0 %v138
  %186 = vmatprep.subr.mxu0 0.0
  %187 = vmatpush1.msra.mxu0 %v137
  %188 = vmatprep.subr.mxu0 0.0
  %189 = vmatpush1.msra.mxu0 %v136
  %190 = vmatprep.subr.mxu0 0.0
  %191 = vmatpush1.msra.mxu0 %v135
  %192 = vmatprep.subr.mxu0 0.0
  %193 = vmatpush1.msra.mxu0 %v134
  %194 = vmatprep.subr.mxu0 0.0
  %195 = vmatpush2.msra.mxu0 0.0
  %196 = vmatprep.subr.mxu0 0.0
  %197 = vmatpush2.msra.mxu0 0.0
  %198 = vmatprep.subr.mxu0 0.0
  %199 = vmatpush2.msra.mxu0 0.0
  %200 = vmatprep.subr.mxu0 0.0
  %201 = vmatpush2.msra.mxu0 0.0
  %202 = vmatprep.subr.mxu0 0.0
  %203 = vmatpush2.msra.mxu0 0.0
  %204 = vmatprep.subr.mxu0 0.0
  %205 = vmatpush2.msra.mxu0 0.0
  %206 = vmatprep.subr.mxu0 0.0
  %207 = vmatpush2.msra.mxu0 0.0
  %208 = vmatprep.subr.mxu0 0.0
  %209 = vmatpush2.msra.mxu0 0.0
  %210 = vmatprep.subr.mxu0 0.0
  %211 = vmatpush2.msra.mxu0 0.0
  %212 = vmatprep.subr.mxu0 0.0
  %213 = vmatpush2.msra.mxu0 0.0
  %214 = vmatprep.subr.mxu0 0.0
  %215 = vmatpush2.msra.mxu0 0.0
  %216 = vmatprep.subr.mxu0 0.0
  %217 = vmatpush2.msra.mxu0 0.0
  %218 = vmatprep.subr.mxu0 0.0
  %219 = vmatpush2.msra.mxu0 0.0
  %220 = vmatprep.subr.mxu0 0.0
  %221 = vmatpush2.msra.mxu0 0.0
  %222 = vmatprep.subr.mxu0 0.0
  %223 = vmatpush2.msra.mxu0 0.0
  %224 = vmatprep.subr.mxu0 0.0
  %225 = vmatpush2.msra.mxu0 0.0
  %226 = vmatprep.mubr.f32.mxu0 0.0
  %227 = vmatmul.mubr.f32.gmra.mxu0 %v151
  %v228 = vpop.f32.mrf.mxu0
  %v229 = vadd.f32 %v147, %v228
  %v230 = vpop.f32.mrf.mxu0
  %231 = vmatprep.mubr.f32.mxu0 0.0
  %232 = vmatmul.mubr.f32.gmra.mxu0 %v154
  %v233 = vpop.f32.mrf.mxu0
  %v234 = vadd.f32 %v147, %v233
  %v235 = vpop.f32.mrf.mxu0
  %236 = vmatprep.mubr.f32.mxu0 0.0
  %237 = vmatmul.mubr.f32.gmra.mxu0 %v157
  %v238 = vpop.f32.mrf.mxu0
  %v239 = vadd.f32 %v147, %v238
  %v240 = vpop.f32.mrf.mxu0
  %241 = vmatprep.mubr.f32.mxu0 0.0
  %242 = vmatmul.mubr.f32.gmra.mxu0 %v160
  %v243 = vpop.f32.mrf.mxu0
  %v244 = vadd.f32 %v147, %v243
  %v245 = vpop.f32.mrf.mxu0
  %246 = vdwg.mxu0
  %vm247 = vcmask 15360
  %248 = vst.msk [vmem:[%s5] sm:$0xff] %vm247, %v229
  %249 = vst.msk [vmem:[%s5 + $0x8] sm:$0xff] %vm247, %v234
  %250 = vst.msk [vmem:[%s5 + $0x10] sm:$0xff] %vm247, %v239
  %251 = vst.msk [vmem:[%s5 + $0x18] sm:$0xff] %vm247, %v244
  // Predicated region
  $region22: #{qnetwork_forward.1} parent=0 // pred_check
    _
  $region23: #{qnetwork_forward.1} parent=0 // pred_check_branch
    %253 = sbr.rel (0) target = $region25
  $region24: #{qnetwork_forward.1} parent=0 // pred_region
    _
  $region25: #{qnetwork_forward.1} parent=0 // pred_fallthru
    _
  // Predicated region
  $region26: #{qnetwork_forward.1} parent=0 // pred_check
    _
  $region27: #{qnetwork_forward.1} parent=0 // pred_check_branch
    %255 = sbr.rel (0) target = $region29
  $region28: #{qnetwork_forward.1} parent=0 // pred_region
    _
  $region29: #{qnetwork_forward.1} parent=0 // pred_fallthru
    _

</llo_original>
